<compile_context>
chip_gen: v6e
topology: v6e:2x2x1
jax: 0.10.0
libtpu: 0.0.40
codegen_flags: <defaults>
</compile_context>

<pallas_src>
import jax
import jax.numpy as jnp
from jax.experimental import pallas as pl
from jax.experimental.pallas import tpu as pltpu

LANE = 128
SUBLANE = 8


def _term_kernel(x_ref, w1_ref, params_ref, b2_ref, slab_ref):
    s = pl.program_id(0)
    B = x_ref.shape[0]
    hp = slab_ref.shape[1] - LANE          # lane-padded hidden width (static)

    x = x_ref[...]                          # [B, D]   (dropout p=0 == identity)
    b1 = params_ref[0:1, :]                 # [1, Hp]
    gamma = params_ref[1:2, :]              # [1, Hp]
    beta = params_ref[2:3, :]               # [1, Hp]
    w2t = params_ref[3:4, :]                # [1, Hp]  (linear2 weight, transposed row)
    b2 = b2_ref[s]                          # scalar from SMEM

    # linear1 + tanh (MXU matmul, f32 accumulate; K=D handled without padding).
    # Padded H lanes: w1/b1 padding is zero -> h = tanh(0) = 0 there.
    h = jnp.tanh(jnp.dot(x, w1_ref[...], preferred_element_type=jnp.float32) + b1)

    # BatchNorm1d training-mode batch statistics (biased variance, eps=1e-5),
    # two-pass (centered) form to match the reference numerics.
    inv_b = 1.0 / B
    mean = jnp.sum(h, axis=0, keepdims=True) * inv_b
    c = h - mean
    var = jnp.sum(c * c, axis=0, keepdims=True) * inv_b
    hidden = gamma * c * jax.lax.rsqrt(var + 1e-5) + beta     # padded lanes stay 0

    # linear2 + tanh: output width 1 -> VPU multiply + lane reduction (padded
    # lanes of w2t are zero), not a degenerate N=1 MXU matmul.
    out = jnp.tanh(jnp.sum(hidden * w2t, axis=-1, keepdims=True) + b2)   # [B, 1]

    # Single lane-dense output slab: hidden in [:, :hp], out broadcast into the
    # trailing 128-lane chunk (unmasked stores, one writeback DMA).
    slab_ref[:, :hp] = hidden.astype(slab_ref.dtype)
    slab_ref[:, hp:] = jnp.broadcast_to(out, (B, LANE)).astype(slab_ref.dtype)


def term_module_stacked(x, w1, b1, gamma, beta, w2, b2):
    """S stacked TermModule instances in one pallas_call.

    x:[S,B,D]  w1:[S,D,H]  b1/gamma/beta:[S,H] (or [S,1,H])  w2:[S,H] or [S,H,1]
    b2:[S] (or any shape with S elements).  Returns (out [S,B,1], hidden [S,B,H]).
    """
    x = x.astype(jnp.float32)
    S, B, D = x.shape
    H = w1.shape[-1]
    Hp = pl.cdiv(H, LANE) * LANE

    # Pad only the H (lane) dim of w1; zeros keep padded lanes exact.
    w1p = jnp.zeros((S, D, Hp), jnp.float32).at[:, :, :H].set(
        w1.astype(jnp.float32))

    # Pack the four per-feature parameter rows into one [S, 8, Hp] slab
    # (rows: b1, gamma, beta, w2^T; rows 4-7 and lanes >= H are zero).
    params = jnp.zeros((S, SUBLANE, Hp), jnp.float32)
    params = params.at[:, 0, :H].set(b1.reshape(S, H).astype(jnp.float32))
    params = params.at[:, 1, :H].set(gamma.reshape(S, H).astype(jnp.float32))
    params = params.at[:, 2, :H].set(beta.reshape(S, H).astype(jnp.float32))
    params = params.at[:, 3, :H].set(w2.reshape(S, H).astype(jnp.float32))

    b2s = b2.reshape(S).astype(jnp.float32)            # 1-D f32 SMEM (4*S bytes)

    flops = S * (2 * B * D * Hp + 12 * B * Hp)
    transcendentals = S * (B * Hp + B)
    bytes_accessed = 4 * (x.size + w1p.size + params.size + b2s.size
                          + S * B * (Hp + LANE))

    slab = pl.pallas_call(
        _term_kernel,
        out_shape=jax.ShapeDtypeStruct((S, B, Hp + LANE), jnp.float32),
        grid=(S,),
        in_specs=[
            pl.BlockSpec((pl.Squeezed(), B, D), lambda s: (s, 0, 0)),
            pl.BlockSpec((pl.Squeezed(), D, Hp), lambda s: (s, 0, 0)),
            pl.BlockSpec((pl.Squeezed(), SUBLANE, Hp), lambda s: (s, 0, 0)),
            pl.BlockSpec(memory_space=pltpu.MemorySpace.SMEM),   # b2, untiled
        ],
        out_specs=pl.BlockSpec((pl.Squeezed(), B, Hp + LANE), lambda s: (s, 0, 0)),
        compiler_params=pltpu.CompilerParams(
            dimension_semantics=("parallel",)),          # 2x on v7x (2 TCs/chip)
        cost_estimate=pl.CostEstimate(
            flops=flops, transcendentals=transcendentals,
            bytes_accessed=bytes_accessed),
    )(x, w1p, params, b2s)

    hidden = slab[:, :, :H]
    out = slab[:, :, Hp:Hp + 1]
    return out, hidden


def term_module(x, w1, b1, gamma, beta, w2, b2):
    """Single-instance TermModule forward (same API as before)."""
    out, hidden = term_module_stacked(
        x[None],
        w1[None],
        jnp.reshape(b1, (1, -1)),
        jnp.reshape(gamma, (1, -1)),
        jnp.reshape(beta, (1, -1)),
        jnp.reshape(w2, (1, -1)),
        jnp.reshape(b2, (1,)),
    )
    return out[0], hidden[0]


def reference(x, w1, b1, gamma, beta, w2, b2):
    h = jnp.tanh(x @ w1 + b1)
    mean = jnp.mean(h, axis=0, keepdims=True)
    var = jnp.mean((h - mean) ** 2, axis=0, keepdims=True)
    hidden = gamma * (h - mean) / jnp.sqrt(var + 1e-5) + beta
    out = jnp.tanh(hidden @ w2 + b2)
    return out, hidden


if __name__ == "__main__":
    B, D, H = 8, 32, 32  # batch, input_size, hidden_size

    key = jax.random.PRNGKey(0)
    kx, kw1, kb1, kw2, kb2 = jax.random.split(key, 5)

    x = jax.random.normal(kx, (B, D), dtype=jnp.float32)

    # Deterministic parameter init (PyTorch-like uniform fan-in bounds).
    lim1 = 1.0 / jnp.sqrt(D)
    w1 = jax.random.uniform(kw1, (D, H), jnp.float32, -lim1, lim1)   # linear1.weight.T
    b1 = jax.random.uniform(kb1, (1, H), jnp.float32, -lim1, lim1)   # linear1.bias
    gamma = jnp.ones((1, H), jnp.float32)                            # batchnorm.weight
    beta = jnp.zeros((1, H), jnp.float32)                            # batchnorm.bias
    lim2 = 1.0 / jnp.sqrt(H)
    w2 = jax.random.uniform(kw2, (H, 1), jnp.float32, -lim2, lim2)   # linear2.weight.T
    b2 = jax.random.uniform(kb2, (1, 1), jnp.float32, -lim2, lim2)   # linear2.bias

    # --- single-instance forward (module semantics) ---
    out, hidden = term_module(x, w1, b1, gamma, beta, w2, b2)
    jax.block_until_ready((out, hidden))

    out_ref, hidden_ref = reference(x, w1, b1, gamma, beta, w2, b2)
    assert out.shape == (B, 1) and hidden.shape == (B, H)
    assert jnp.allclose(hidden, hidden_ref, atol=1e-5), "hidden mismatch"
    assert jnp.allclose(out, out_ref, atol=1e-5), "out mismatch"

    # --- stacked forward: S instances amortized behind one launch (grid=(S,)) ---
    S = 3
    xs = jnp.stack([x, 0.5 * x, -x])
    outs, hiddens = term_module_stacked(
        xs,
        jnp.stack([w1] * S),
        jnp.stack([b1] * S),
        jnp.stack([gamma] * S),
        jnp.stack([beta] * S),
        jnp.stack([w2] * S),
        jnp.stack([b2] * S),
    )
    jax.block_until_ready((outs, hiddens))
    for i in range(S):
        o_r, h_r = reference(xs[i], w1, b1, gamma, beta, w2, b2)
        assert jnp.allclose(hiddens[i], h_r, atol=1e-5), f"stacked hidden mismatch {i}"
        assert jnp.allclose(outs[i], o_r, atol=1e-5), f"stacked out mismatch {i}"

    print("KERNEL_OK")
</pallas_src>

<mosaic_0001>
module attributes {stable_mosaic.version = 11 : i64} {
  func.func @_term_kernel(%arg0: i32, %arg1: memref<1x8x32xf32, #tpu.memory_space<vmem>>, %arg2: memref<1x32x128xf32, #tpu.memory_space<vmem>>, %arg3: memref<1x8x128xf32, #tpu.memory_space<vmem>>, %arg4: memref<1xf32, #tpu.memory_space<smem>>, %arg5: memref<1x8x256xf32, #tpu.memory_space<vmem>>) attributes {dimension_semantics = [#tpu.dimension_semantics<parallel>], iteration_bounds = array<i64: 1>, scalar_prefetch = 0 : i64, scratch_operands = 0 : i64, tpu.core_type = #tpu.core_type<tc>, window_params = [{transform_indices = @transform_0, window_bounds = array<i64: 1, 8, 32>}, {transform_indices = @transform_1, window_bounds = array<i64: 1, 32, 128>}, {transform_indices = @transform_2, window_bounds = array<i64: 1, 8, 128>}, {transform_indices = @transform_3, window_bounds = array<i64: 1>}, {transform_indices = @transform_4, window_bounds = array<i64: 1, 8, 256>}]} {
    %c0 = arith.constant 0 : index
    %c0_0 = arith.constant 0 : index
    %c0_1 = arith.constant 0 : index
    %0 = vector.load %arg1[%c0, %c0_0, %c0_1] : memref<1x8x32xf32, #tpu.memory_space<vmem>>, vector<1x8x32xf32>
    %1 = vector.shape_cast %0 : vector<1x8x32xf32> to vector<8x32xf32>
    %c0_2 = arith.constant 0 : index
    %c0_3 = arith.constant 0 : index
    %c0_4 = arith.constant 0 : index
    %2 = vector.load %arg3[%c0_2, %c0_3, %c0_4] : memref<1x8x128xf32, #tpu.memory_space<vmem>>, vector<1x1x128xf32>
    %3 = vector.shape_cast %2 : vector<1x1x128xf32> to vector<1x128xf32>
    %c0_5 = arith.constant 0 : index
    %c1 = arith.constant 1 : index
    %c0_6 = arith.constant 0 : index
    %4 = vector.load %arg3[%c0_5, %c1, %c0_6] : memref<1x8x128xf32, #tpu.memory_space<vmem>>, vector<1x1x128xf32>
    %5 = vector.shape_cast %4 : vector<1x1x128xf32> to vector<1x128xf32>
    %c0_7 = arith.constant 0 : index
    %c2 = arith.constant 2 : index
    %c0_8 = arith.constant 0 : index
    %6 = vector.load %arg3[%c0_7, %c2, %c0_8] : memref<1x8x128xf32, #tpu.memory_space<vmem>>, vector<1x1x128xf32>
    %7 = vector.shape_cast %6 : vector<1x1x128xf32> to vector<1x128xf32>
    %c0_9 = arith.constant 0 : index
    %c3 = arith.constant 3 : index
    %c0_10 = arith.constant 0 : index
    %8 = vector.load %arg3[%c0_9, %c3, %c0_10] : memref<1x8x128xf32, #tpu.memory_space<vmem>>, vector<1x1x128xf32>
    %9 = vector.shape_cast %8 : vector<1x1x128xf32> to vector<1x128xf32>
    %10 = arith.index_cast %arg0 : i32 to index
    %11 = memref.load %arg4[%10] : memref<1xf32, #tpu.memory_space<smem>>
    %c0_11 = arith.constant 0 : index
    %c0_12 = arith.constant 0 : index
    %c0_13 = arith.constant 0 : index
    %12 = vector.load %arg2[%c0_11, %c0_12, %c0_13] : memref<1x32x128xf32, #tpu.memory_space<vmem>>, vector<1x32x128xf32>
    %13 = vector.shape_cast %12 : vector<1x32x128xf32> to vector<32x128xf32>
    %cst = arith.constant dense<0.000000e+00> : vector<8x128xf32>
    %14 = tpu.matmul %1, %13, %cst {dimension_numbers = #tpu.dot_dimension_numbers<[1], [0], [0], [1], [0, 0, 1, 1], [], []>} : vector<8x32xf32>, vector<32x128xf32>, vector<8x128xf32> -> vector<8x128xf32>
    %15 = vector.broadcast %3 : vector<1x128xf32> to vector<8x128xf32>
    %16 = arith.addf %14, %15 : vector<8x128xf32>
    %17 = math.tanh %16 : vector<8x128xf32>
    %cst_14 = arith.constant dense<0.000000e+00> : vector<128xf32>
    %18 = vector.multi_reduction <add>, %17, %cst_14 [0] : vector<8x128xf32> to vector<128xf32>
    %19 = vector.shape_cast %18 : vector<128xf32> to vector<1x128xf32>
    %cst_15 = arith.constant 1.250000e-01 : f32
    %20 = vector.broadcast %cst_15 : f32 to vector<1x128xf32>
    %21 = arith.mulf %19, %20 : vector<1x128xf32>
    %22 = vector.broadcast %21 : vector<1x128xf32> to vector<8x128xf32>
    %23 = arith.subf %17, %22 : vector<8x128xf32>
    %24 = arith.mulf %23, %23 : vector<8x128xf32>
    %cst_16 = arith.constant dense<0.000000e+00> : vector<128xf32>
    %25 = vector.multi_reduction <add>, %24, %cst_16 [0] : vector<8x128xf32> to vector<128xf32>
    %26 = vector.shape_cast %25 : vector<128xf32> to vector<1x128xf32>
    %cst_17 = arith.constant 1.250000e-01 : f32
    %27 = vector.broadcast %cst_17 : f32 to vector<1x128xf32>
    %28 = arith.mulf %26, %27 : vector<1x128xf32>
    %29 = vector.broadcast %5 : vector<1x128xf32> to vector<8x128xf32>
    %30 = arith.mulf %29, %23 : vector<8x128xf32>
    %cst_18 = arith.constant 9.99999974E-6 : f32
    %31 = vector.broadcast %cst_18 : f32 to vector<1x128xf32>
    %32 = arith.addf %28, %31 : vector<1x128xf32>
    %33 = math.rsqrt %32 : vector<1x128xf32>
    %34 = vector.broadcast %33 : vector<1x128xf32> to vector<8x128xf32>
    %35 = arith.mulf %30, %34 : vector<8x128xf32>
    %36 = vector.broadcast %7 : vector<1x128xf32> to vector<8x128xf32>
    %37 = arith.addf %35, %36 : vector<8x128xf32>
    %38 = vector.broadcast %9 : vector<1x128xf32> to vector<8x128xf32>
    %39 = arith.mulf %37, %38 : vector<8x128xf32>
    %cst_19 = arith.constant dense<0.000000e+00> : vector<8xf32>
    %40 = vector.multi_reduction <add>, %39, %cst_19 [1] : vector<8x128xf32> to vector<8xf32>
    %41 = vector.shape_cast %40 : vector<8xf32> to vector<8x1xf32>
    %42 = vector.broadcast %11 : f32 to vector<8x1xf32>
    %43 = arith.addf %41, %42 : vector<8x1xf32>
    %44 = math.tanh %43 : vector<8x1xf32>
    %c0_20 = arith.constant 0 : index
    %c0_21 = arith.constant 0 : index
    %c0_22 = arith.constant 0 : index
    %45 = vector.load %arg5[%c0_20, %c0_21, %c0_22] : memref<1x8x256xf32, #tpu.memory_space<vmem>>, vector<1x8x128xf32>
    %46 = vector.shape_cast %45 : vector<1x8x128xf32> to vector<8x128xf32>
    %47 = vector.shape_cast %37 : vector<8x128xf32> to vector<1x8x128xf32>
    tpu.vector_store %arg5[%c0_20, %c0_21, %c0_22], %47 {strides = array<i32>} : memref<1x8x256xf32, #tpu.memory_space<vmem>>, vector<1x8x128xf32>,
    %48 = vector.shape_cast %44 : vector<8x1xf32> to vector<8x1xf32>
    %49 = vector.broadcast %48 : vector<8x1xf32> to vector<8x128xf32>
    %c0_23 = arith.constant 0 : index
    %c0_24 = arith.constant 0 : index
    %c128 = arith.constant 128 : index
    %50 = vector.load %arg5[%c0_23, %c0_24, %c128] : memref<1x8x256xf32, #tpu.memory_space<vmem>>, vector<1x8x128xf32>
    %51 = vector.shape_cast %50 : vector<1x8x128xf32> to vector<8x128xf32>
    %52 = vector.shape_cast %49 : vector<8x128xf32> to vector<1x8x128xf32>
    tpu.vector_store %arg5[%c0_23, %c0_24, %c128], %52 {strides = array<i32>} : memref<1x8x256xf32, #tpu.memory_space<vmem>>, vector<1x8x128xf32>,
    return
  }
  func.func @transform_0(%arg0: i32) -> (i32, i32, i32) {
    %c0_i32 = arith.constant 0 : i32
    %c0_i32_0 = arith.constant 0 : i32
    %c0_i32_1 = arith.constant 0 : i32
    return %arg0, %c0_i32, %c0_i32_0 : i32, i32, i32
  }
  func.func @transform_1(%arg0: i32) -> (i32, i32, i32) {
    %c0_i32 = arith.constant 0 : i32
    %c0_i32_0 = arith.constant 0 : i32
    %c0_i32_1 = arith.constant 0 : i32
    return %arg0, %c0_i32, %c0_i32_0 : i32, i32, i32
  }
  func.func @transform_2(%arg0: i32) -> (i32, i32, i32) {
    %c0_i32 = arith.constant 0 : i32
    %c0_i32_0 = arith.constant 0 : i32
    %c0_i32_1 = arith.constant 0 : i32
    return %arg0, %c0_i32, %c0_i32_0 : i32, i32, i32
  }
  func.func @transform_3(%arg0: i32) -> i32 {
    %c0_i32 = arith.constant 0 : i32
    %c0_i32_0 = arith.constant 0 : i32
    return %c0_i32 : i32
  }
  func.func @transform_4(%arg0: i32) -> (i32, i32, i32) {
    %c0_i32 = arith.constant 0 : i32
    %c0_i32_0 = arith.constant 0 : i32
    %c0_i32_1 = arith.constant 0 : i32
    return %arg0, %c0_i32, %c0_i32_0 : i32, i32, i32
  }
}

</mosaic_0001>

<llo_original>
// kernel: tpu_custom_call.1
$region0: #{tpu_custom_call.1}
  #allocation0 [shape = 'u32[]', space=smem, size = 0x4, offset = 0x4, fixed_abs, tag = 'smem constant byte address 0x4 - core index']
  #allocation1 [shape = 'u32[144,128]{1,0:T(1,128)}', space=vmem, size = 0x12000, scoped, tag = 'internal scratch']
  #allocation2 [shape = 'f32[1]{0:T(128)S(6)}', space=smem, size = 0x200, scoped, tag = 'scoped memory for tpu_custom_call.1']
  %s0 = inlined_call_operand.hbm [shape: f32[1,8,32], index: 0, kind: input, shape index: {}]
  %s1 = inlined_call_operand.hbm [shape: f32[1,32,128], index: 1, kind: input, shape index: {}]
  %s2 = inlined_call_operand.hbm [shape: f32[1,8,128], index: 2, kind: input, shape index: {}]
  %s3 = inlined_call_operand.<no memory space> [shape: f32[1], index: 3, kind: input, shape index: {}]
  %s4 = inlined_call_operand.hbm [shape: f32[1,8,256], index: 4, kind: output, shape index: {}]
  %s5 = sld [smem:[#allocation0]]
  $region38: #{tpu_custom_call.1} parent=0
    _
  %s7 = ssub.s32 1, %s5
  %s8 = scalar_select 0, %s7, %s5
  %9 = sst [smem:[#allocation2]] %s3
  $region1: #{tpu_custom_call.1} parent=0
    #allocation3 [shape = 'u8[4096]{0}', space=vmem, size = 0x1000, scoped, tag = 'input window, operand 0, single buffered']
    #allocation4 [shape = 's32[1]{0}', space=sflag, size = 0x4, scoped, tag = 'scoped memory for tpu_custom_call.1']
    #allocation5 [shape = 's32[1]{0}', space=sflag, size = 0x4, scoped, tag = 'scoped memory for tpu_custom_call.1']
    #allocation6 [shape = 'u8[16384]{0}', space=vmem, size = 0x4000, scoped, tag = 'input window, operand 1, single buffered']
    #allocation7 [shape = 's32[1]{0}', space=sflag, size = 0x4, scoped, tag = 'scoped memory for tpu_custom_call.1']
    #allocation8 [shape = 'u8[4096]{0}', space=vmem, size = 0x1000, scoped, tag = 'input window, operand 2, single buffered']
    #allocation9 [shape = 'u8[8192]{0}', space=vmem, size = 0x2000, scoped, tag = 'output window, operand 0, single buffered']
    %10 = vsyncpa [#allocation4], 0
    %11 = vsyncpa [#allocation7], 0
    %12 = vsyncpa [#allocation5], 0
    // Predicated region
    $region2: #{tpu_custom_call.1} parent=1 // pred_check
      _
    $region3: #{tpu_custom_call.1} parent=1 // pred_check_branch
      %14 = sbr.rel (0) target = $region5
    $region4: #{tpu_custom_call.1} parent=1 // pred_region
      %s16 = ssub.s32 128, 128
      %17 = vsyncadd [#allocation4], %s16
      %s19 = sshll.u32 [#allocation3], 4
      %s20 = int_to_ptr.vmem [resolvable:$true] %s19
      %22 = dma.hbm_to_vmem [thread:$0]  %s0, 128, %s20, [#allocation4]
    $region5: #{tpu_custom_call.1} parent=1 // pred_fallthru
      _
    // Predicated region
    $region6: #{tpu_custom_call.1} parent=1 // pred_check
      _
    $region7: #{tpu_custom_call.1} parent=1 // pred_check_branch
      %24 = sbr.rel (0) target = $region9
    $region8: #{tpu_custom_call.1} parent=1 // pred_region
      %s26 = ssub.s32 512, 512
      %27 = vsyncadd [#allocation7], %s26
      %s28 = sshll.u32 [#allocation6], 4
      %s29 = int_to_ptr.vmem [resolvable:$true] %s28
      %34 = dma.hbm_to_vmem [thread:$0]  %s1, 512, %s29, [#allocation7], 128, 128, 8
    $region9: #{tpu_custom_call.1} parent=1 // pred_fallthru
      _
    // Predicated region
    $region10: #{tpu_custom_call.1} parent=1 // pred_check
      _
    $region11: #{tpu_custom_call.1} parent=1 // pred_check_branch
      %36 = sbr.rel (0) target = $region13
    $region12: #{tpu_custom_call.1} parent=1 // pred_region
      %s38 = ssub.s32 128, 128
      %39 = vsyncadd [#allocation7], %s38
      %s41 = sshll.u32 [#allocation8], 4
      %s42 = int_to_ptr.vmem [resolvable:$true] %s41
      %44 = dma.hbm_to_vmem [thread:$0]  %s2, 128, %s42, [#allocation7]
    $region13: #{tpu_custom_call.1} parent=1 // pred_fallthru
      _
    // Predicated region
    $region14: #{tpu_custom_call.1} parent=1 // pred_check
      _
    $region15: #{tpu_custom_call.1} parent=1 // pred_check_branch
      %46 = sbr.rel (0) target = $region17
    $region16: #{tpu_custom_call.1} parent=1 // pred_region
      _
    $region17: #{tpu_custom_call.1} parent=1 // pred_fallthru
      _
    // Predicated region
    $region18: #{tpu_custom_call.1} parent=1 // pred_check
      _
    $region19: #{tpu_custom_call.1} parent=1 // pred_check_branch
      %48 = sbr.rel (0) target = $region21
    $region20: #{tpu_custom_call.1} parent=1 // pred_region
      %49 = dma.done [#allocation4], 128
    $region21: #{tpu_custom_call.1} parent=1 // pred_fallthru
      _
    // Predicated region
    $region22: #{tpu_custom_call.1} parent=1 // pred_check
      _
    $region23: #{tpu_custom_call.1} parent=1 // pred_check_branch
      %51 = sbr.rel (0) target = $region25
    $region24: #{tpu_custom_call.1} parent=1 // pred_region
      %52 = dma.done [#allocation7], 512
    $region25: #{tpu_custom_call.1} parent=1 // pred_fallthru
      _
    // Predicated region
    $region26: #{tpu_custom_call.1} parent=1 // pred_check
      _
    $region27: #{tpu_custom_call.1} parent=1 // pred_check_branch
      %54 = sbr.rel (0) target = $region29
    $region28: #{tpu_custom_call.1} parent=1 // pred_region
      %55 = dma.done [#allocation7], 128
    $region29: #{tpu_custom_call.1} parent=1 // pred_fallthru
      _
    %v56 = vld [vmem:[#allocation3] sm:$0xff]
    %v57 = vld [vmem:[#allocation8] sm:$0x1]
    %v58 = vld [vmem:[#allocation8 + $0x1] sm:$0x1]
    %v59 = vld [vmem:[#allocation8 + $0x2] sm:$0x1]
    %v60 = vld [vmem:[#allocation8 + $0x3] sm:$0x1]
    %s61 = sld [smem:[#allocation2]]
    %v62 = vld [vmem:[#allocation6] sm:$0xff]
    %v63 = vld [vmem:[#allocation6 + $0x8] sm:$0xff]
    %v64 = vld [vmem:[#allocation6 + $0x10] sm:$0xff]
    %v65 = vld [vmem:[#allocation6 + $0x18] sm:$0xff]
    %v66 = vlaneseq
    %v67 = vshrl.u32 %v66, 7
    %v68 = vsub.s32 0, %v67
    %v69 = vrot.slane %v57, %v68
    %vm70 = vcmask 261120
    %v72 = vsel %vm70, %v56, 0
    %74 = vmatprep.subr.mxu0 0.0
    %75 = vmatpush1.msra.mxu0 0.0
    %76 = vmatprep.subr.mxu0 0.0
    %77 = vmatpush1.msra.mxu0 0.0
    %78 = vmatprep.subr.mxu0 0.0
    %79 = vmatpush1.msra.mxu0 0.0
    %80 = vmatprep.subr.mxu0 0.0
    %81 = vmatpush1.msra.mxu0 0.0
    %82 = vmatprep.subr.mxu0 0.0
    %83 = vmatpush1.msra.mxu0 0.0
    %84 = vmatprep.subr.mxu0 0.0
    %85 = vmatpush1.msra.mxu0 0.0
    %86 = vmatprep.subr.mxu0 0.0
    %87 = vmatpush1.msra.mxu0 0.0
    %88 = vmatprep.subr.mxu0 0.0
    %89 = vmatpush1.msra.mxu0 0.0
    %90 = vmatprep.subr.mxu0 0.0
    %91 = vmatpush1.msra.mxu0 0.0
    %92 = vmatprep.subr.mxu0 0.0
    %93 = vmatpush1.msra.mxu0 0.0
    %94 = vmatprep.subr.mxu0 0.0
    %95 = vmatpush1.msra.mxu0 0.0
    %96 = vmatprep.subr.mxu0 0.0
    %97 = vmatpush1.msra.mxu0 0.0
    %98 = vmatprep.subr.mxu0 0.0
    %99 = vmatpush1.msra.mxu0 %v65
    %100 = vmatprep.subr.mxu0 0.0
    %101 = vmatpush1.msra.mxu0 %v64
    %102 = vmatprep.subr.mxu0 0.0
    %103 = vmatpush1.msra.mxu0 %v63
    %104 = vmatprep.subr.mxu0 0.0
    %105 = vmatpush1.msra.mxu0 %v62
    %106 = vmatprep.subr.mxu0 0.0
    %107 = vmatpush2.msra.mxu0 0.0
    %108 = vmatprep.subr.mxu0 0.0
    %109 = vmatpush2.msra.mxu0 0.0
    %110 = vmatprep.subr.mxu0 0.0
    %111 = vmatpush2.msra.mxu0 0.0
    %112 = vmatprep.subr.mxu0 0.0
    %113 = vmatpush2.msra.mxu0 0.0
    %114 = vmatprep.subr.mxu0 0.0
    %115 = vmatpush2.msra.mxu0 0.0
    %116 = vmatprep.subr.mxu0 0.0
    %117 = vmatpush2.msra.mxu0 0.0
    %118 = vmatprep.subr.mxu0 0.0
    %119 = vmatpush2.msra.mxu0 0.0
    %120 = vmatprep.subr.mxu0 0.0
    %121 = vmatpush2.msra.mxu0 0.0
    %122 = vmatprep.subr.mxu0 0.0
    %123 = vmatpush2.msra.mxu0 0.0
    %124 = vmatprep.subr.mxu0 0.0
    %125 = vmatpush2.msra.mxu0 0.0
    %126 = vmatprep.subr.mxu0 0.0
    %127 = vmatpush2.msra.mxu0 0.0
    %128 = vmatprep.subr.mxu0 0.0
    %129 = vmatpush2.msra.mxu0 0.0
    %130 = vmatprep.subr.mxu0 0.0
    %131 = vmatpush2.msra.mxu0 0.0
    %132 = vmatprep.subr.mxu0 0.0
    %133 = vmatpush2.msra.mxu0 0.0
    %134 = vmatprep.subr.mxu0 0.0
    %135 = vmatpush2.msra.mxu0 0.0
    %136 = vmatprep.subr.mxu0 0.0
    %137 = vmatpush2.msra.mxu0 0.0
    %138 = vmatprep.mubr.f32.mxu0 0.0
    %139 = vmatmul.mubr.f32.gmra.mxu0 %v72
    %v140 = vpop.f32.mrf.mxu0
    %v141 = vadd.f32 %v69, %v140
    %v142 = vpop.f32.mrf.mxu0
    %143 = vdwg.mxu0
    %v144 = vtanh.pop %v141
    %v145 = vrot.slane %v144, 4
    %v146 = vadd.f32 %v144, %v145
    %v147 = vrot.slane %v146, 2
    %v148 = vadd.f32 %v146, %v147
    %v149 = vrot.slane %v148, 1
    %v150 = vadd.f32 %v148, %v149
    %v151 = vmul.f32 %v150, 0.125
    %v152 = vsub.f32 %v144, %v151
    %v153 = vmul.f32 %v152, %v152
    %v154 = vrot.slane %v153, 4
    %v155 = vadd.f32 %v153, %v154
    %v156 = vrot.slane %v155, 2
    %v157 = vadd.f32 %v155, %v156
    %v158 = vrot.slane %v157, 1
    %v159 = vadd.f32 %v157, %v158
    %v160 = vmul.f32 %v159, 0.125
    %v161 = vlaneseq
    %v162 = vshrl.u32 %v161, 7
    %v163 = vsub.s32 0, %v162
    %v164 = vrot.slane %v58, %v163
    %v165 = vmul.f32 %v164, %v152
    %v166 = vadd.f32 %v160, 1e-05
    %v167 = vrsqrt.pop %v166
    %v168 = vmul.f32 %v165, %v167
    %v169 = vlaneseq
    %v170 = vshrl.u32 %v169, 7
    %v171 = vsub.s32 0, %v170
    %v172 = vrot.slane %v59, %v171
    %v173 = vadd.f32 %v168, %v172
    %v174 = vlaneseq
    %v175 = vshrl.u32 %v174, 7
    %v176 = vsub.s32 0, %v175
    %v177 = vrot.slane %v60, %v176
    %v178 = vmul.f32 %v173, %v177
    %179 = vadd.xlane.f32.xlu0 %v178
    %v180 = vpop.xlane.xlu0 %179
    %v181 = vstv %s61
    %v182 = vadd.f32 %v180, %v181
    %v183 = vtanh.pop %v182
    %184 = vst [vmem:[#allocation9] sm:$0xff] %v173
    %185 = vst [vmem:[#allocation9 + $0x8] sm:$0xff] %v183
    // Predicated region
    $region30: #{tpu_custom_call.1} parent=1 // pred_check
      _
    $region31: #{tpu_custom_call.1} parent=1 // pred_check_branch
      %187 = sbr.rel (0) target = $region33
    $region32: #{tpu_custom_call.1} parent=1 // pred_region
      %s189 = ssub.s32 256, 256
      %190 = vsyncadd [#allocation5], %s189
      %s192 = sshll.u32 [#allocation9], 4
      %s193 = int_to_ptr.vmem [resolvable:$true] %s192
      %195 = dma.vmem_to_hbm [thread:$0]  %s193, 256, %s4, [#allocation5]
    $region33: #{tpu_custom_call.1} parent=1 // pred_fallthru
      _
    // Predicated region
    $region34: #{tpu_custom_call.1} parent=1 // pred_check
      _
    $region35: #{tpu_custom_call.1} parent=1 // pred_check_branch
      %197 = sbr.rel (0) target = $region37
    $region36: #{tpu_custom_call.1} parent=1 // pred_region
      %198 = dma.done [#allocation5], 256
    $region37: #{tpu_custom_call.1} parent=1 // pred_fallthru
      _
    %199 = vsyncpa [#allocation4], 1
    %200 = vsyncpa [#allocation7], 1
    %201 = vsyncpa [#allocation5], 1

</llo_original>
